<compile_context>
chip_gen: v7x
topology: tpu7x:2x2x1
jax: 0.10.0
libtpu: 0.0.40
codegen_flags: <defaults>
</compile_context>

<pallas_src>
import functools

import jax
import jax.numpy as jnp
from jax import lax
from jax.experimental import pallas as pl
from jax.experimental.pallas import tpu as pltpu


def _rmsnorm_kernel(x_ref, w_ref, o_ref, *, eps: float, inv_h: float):
    # x_ref: (TR, H) tile of hidden_states (input dtype)
    # w_ref: (1, H)  weight row (float32), constant index_map -> stays VMEM-resident
    # o_ref: (TR, H) output tile
    input_dtype = x_ref.dtype
    x32 = x_ref[...].astype(jnp.float32)
    # sum * (1/H) instead of jnp.mean: 1/H is a compile-time constant.
    mean_sq = jnp.sum(x32 * x32, axis=-1, keepdims=True) * inv_h   # (TR, 1) f32
    normed = x32 * lax.rsqrt(mean_sq + eps)                        # (TR, H) f32, rsqrt on EUP
    # Torch promotion: weight(f32) * normalized.to(input_dtype).
    # The round-trip cast for sub-f32 inputs is INTENTIONAL (matches torch) -- keep it.
    y = w_ref[...] * normed.astype(input_dtype)
    o_ref[...] = y.astype(o_ref.dtype)


def _sublane_multiple(dtype) -> int:
    """Row-tile granularity so sub-32-bit dtypes fill whole sublane groups."""
    itemsize = jnp.dtype(dtype).itemsize
    return max(8, 32 // max(itemsize, 1))   # 8 for f32, 16 for bf16, 32 for int8/fp8


def _vmem_capacity_bytes() -> int:
    """Per-TensorCore VMEM capacity, with a platform-aware fallback."""
    try:
        return int(pltpu.get_tpu_info().vmem_capacity_bytes)
    except Exception:
        pass
    try:
        kind = jax.devices()[0].device_kind.lower()
    except Exception:
        kind = ""
    if "v7" in kind:
        return 64 * 1024 * 1024            # v7x: 64 MiB per TC
    if any(k in kind for k in ("v5", "v6")):
        return 128 * 1024 * 1024           # v5e / v6e: 128 MiB
    return 64 * 1024 * 1024                # unknown: be conservative


def _bytes_per_row(hidden: int, in_dtype, out_dtype) -> int:
    """Per-row VMEM footprint: double-buffered in + out tiles + f32 temporaries.

    The kernel keeps x32 live across the reduction plus the normalized product, so
    budget ~16 B/elem (~4 f32 copies) of temporaries on top of the pipeline buffers.
    """
    in_b = jnp.dtype(in_dtype).itemsize
    out_b = jnp.dtype(out_dtype).itemsize
    return hidden * (2 * in_b + 2 * out_b + 16)


def _pick_row_tile(rows: int, hidden: int, in_dtype, out_dtype,
                   tile_budget_bytes: int, min_grid_steps: int = 4) -> int:
    sub = _sublane_multiple(in_dtype)
    # Byte-based cap from the VMEM budget.
    tile = tile_budget_bytes // max(_bytes_per_row(hidden, in_dtype, out_dtype), 1)
    tile = max((tile // sub) * sub, sub)
    # Minimum-grid-steps clamp: keep >= min_grid_steps steps (>= 2 per TC on v7x)
    # whenever the row count allows, so double-buffering actually overlaps.
    rows_rounded = -(-rows // sub) * sub
    if rows_rounded >= min_grid_steps * sub:
        max_tile_for_steps = max(((rows_rounded // min_grid_steps) // sub) * sub, sub)
        tile = min(tile, max_tile_for_steps)
    return max(min(tile, rows_rounded), sub)


def rmsnorm(hidden_states: jax.Array, weight: jax.Array, eps: float = 1e-8,
            row_tile: int | None = None, out_dtype=None) -> jax.Array:
    """RMSNorm over the last axis of `hidden_states`.

    hidden_states: (..., hidden); weight: (hidden,) (treated as float32, matching
    nn.Parameter(torch.ones(hidden_size))).

    out_dtype=None (default) follows torch promotion of weight(f32) * normed(input
    dtype) -> f32. Passing out_dtype=hidden_states.dtype emits bf16 for bf16 inputs
    (~33% less HBM traffic) at the cost of deviating from exact torch promotion.
    """
    orig_shape = hidden_states.shape
    hidden = orig_shape[-1]
    x2d = hidden_states.reshape(-1, hidden)
    rows = x2d.shape[0]

    promoted = jnp.promote_types(weight.dtype, hidden_states.dtype)
    out_dtype = promoted if out_dtype is None else jnp.dtype(out_dtype)
    w2d = weight.reshape(1, hidden).astype(jnp.float32)

    vmem_cap = _vmem_capacity_bytes()

    if row_tile is None:
        row_tile = _pick_row_tile(rows, hidden, x2d.dtype, out_dtype,
                                  int(vmem_cap * 0.6))

    # vmem limit from the actual per-step footprint + weight buffers + margin.
    footprint = (row_tile * _bytes_per_row(hidden, x2d.dtype, out_dtype)
                 + 2 * hidden * 4 + (8 << 20))
    vmem_limit = min(max(footprint, 32 << 20), vmem_cap - (4 << 20))

    grid = (pl.cdiv(rows, row_tile),)   # partial tail block is masked by Pallas
    kernel = functools.partial(_rmsnorm_kernel, eps=eps, inv_h=1.0 / hidden)

    out = pl.pallas_call(
        kernel,
        out_shape=jax.ShapeDtypeStruct((rows, hidden), out_dtype),
        grid_spec=pltpu.PrefetchScalarGridSpec(
            num_scalar_prefetch=0,
            grid=grid,
            in_specs=[
                pl.BlockSpec((row_tile, hidden), lambda i: (i, 0)),
                pl.BlockSpec((1, hidden), lambda i: (0, 0)),   # constant index -> resident
            ],
            out_specs=pl.BlockSpec((row_tile, hidden), lambda i: (i, 0)),
        ),
        compiler_params=pltpu.CompilerParams(
            dimension_semantics=("parallel",),
            vmem_limit_bytes=int(vmem_limit),
        ),
    )(x2d, w2d)

    return out.reshape(orig_shape[:-1] + (hidden,))


def rmsnorm_ref(hidden_states, weight, eps=1e-8):
    """Pure-JAX reference mirroring the PyTorch forward."""
    input_dtype = hidden_states.dtype
    x32 = hidden_states.astype(jnp.float32)
    out = x32 * lax.rsqrt(jnp.mean(x32 * x32, axis=-1, keepdims=True) + eps)
    return weight * out.astype(input_dtype)


if __name__ == "__main__":
    batch, seq, hidden = 2, 8, 32
    eps = 1e-8

    key = jax.random.PRNGKey(0)
    x = jax.random.normal(key, (batch, seq, hidden), dtype=jnp.float32)

    # Deterministic parameter init (matches nn.Parameter(torch.ones(hidden_size))).
    weight = jnp.ones((hidden,), dtype=jnp.float32)

    # Default path: exact torch promotion (f32 output).
    y = rmsnorm(x, weight, eps=eps)
    y = jax.block_until_ready(y)
    y_ref = rmsnorm_ref(x, weight, eps=eps)
    assert y.shape == x.shape
    assert y.dtype == jnp.float32
    assert jnp.allclose(y, y_ref, atol=1e-5, rtol=1e-5), "mismatch vs reference"

    # Optional bf16-output path (reduced HBM write traffic), gated behind out_dtype.
    x_bf16 = x.astype(jnp.bfloat16)
    y_bf16 = rmsnorm(x_bf16, weight, eps=eps, out_dtype=jnp.bfloat16)
    y_bf16 = jax.block_until_ready(y_bf16)
    y_bf16_ref = rmsnorm_ref(x_bf16, weight, eps=eps).astype(jnp.bfloat16)
    assert y_bf16.dtype == jnp.bfloat16
    assert jnp.allclose(y_bf16.astype(jnp.float32), y_bf16_ref.astype(jnp.float32),
                        atol=2e-2, rtol=2e-2), "bf16 path mismatch vs reference"

    print("KERNEL_OK")
</pallas_src>

<mosaic_0001>
module attributes {stable_mosaic.version = 11 : i64} {
  func.func @_rmsnorm_kernel(%arg0: i32, %arg1: memref<16x32xf32, #tpu.memory_space<vmem>>, %arg2: memref<1x32xf32, #tpu.memory_space<vmem>>, %arg3: memref<16x32xf32, #tpu.memory_space<vmem>>) attributes {dimension_semantics = [#tpu.dimension_semantics<parallel>], iteration_bounds = array<i64: 1>, scalar_prefetch = 0 : i64, scratch_operands = 0 : i64, tpu.core_type = #tpu.core_type<tc>, window_params = [{transform_indices = @transform_0, window_bounds = array<i64: 16, 32>}, {pipeline_mode = #tpu.pipeline_mode<synchronous>, transform_indices = @transform_1, window_bounds = array<i64: 1, 32>}, {transform_indices = @transform_2, window_bounds = array<i64: 16, 32>}]} {
    %c0 = arith.constant 0 : index
    %c0_0 = arith.constant 0 : index
    %0 = vector.load %arg1[%c0, %c0_0] : memref<16x32xf32, #tpu.memory_space<vmem>>, vector<16x32xf32>
    %1 = arith.mulf %0, %0 : vector<16x32xf32>
    %cst = arith.constant dense<0.000000e+00> : vector<16xf32>
    %2 = vector.multi_reduction <add>, %1, %cst [1] : vector<16x32xf32> to vector<16xf32>
    %3 = vector.shape_cast %2 : vector<16xf32> to vector<16x1xf32>
    %cst_1 = arith.constant 3.125000e-02 : f32
    %4 = vector.broadcast %cst_1 : f32 to vector<16x1xf32>
    %5 = arith.mulf %3, %4 : vector<16x1xf32>
    %cst_2 = arith.constant 9.99999993E-9 : f32
    %6 = vector.broadcast %cst_2 : f32 to vector<16x1xf32>
    %7 = arith.addf %5, %6 : vector<16x1xf32>
    %8 = math.rsqrt %7 : vector<16x1xf32>
    %9 = vector.broadcast %8 : vector<16x1xf32> to vector<16x32xf32>
    %10 = arith.mulf %0, %9 : vector<16x32xf32>
    %c0_3 = arith.constant 0 : index
    %c0_4 = arith.constant 0 : index
    %11 = vector.load %arg2[%c0_3, %c0_4] : memref<1x32xf32, #tpu.memory_space<vmem>>, vector<1x32xf32>
    %12 = vector.broadcast %11 : vector<1x32xf32> to vector<16x32xf32>
    %13 = arith.mulf %12, %10 : vector<16x32xf32>
    %c0_5 = arith.constant 0 : index
    %c0_6 = arith.constant 0 : index
    %14 = vector.load %arg3[%c0_5, %c0_6] : memref<16x32xf32, #tpu.memory_space<vmem>>, vector<16x32xf32>
    tpu.vector_store %arg3[%c0_5, %c0_6], %13 {strides = array<i32>} : memref<16x32xf32, #tpu.memory_space<vmem>>, vector<16x32xf32>,
    return
  }
  func.func @transform_0(%arg0: i32) -> (i32, i32) {
    %c0_i32 = arith.constant 0 : i32
    %c0_i32_0 = arith.constant 0 : i32
    return %arg0, %c0_i32 : i32, i32
  }
  func.func @transform_1(%arg0: i32) -> (i32, i32) {
    %c0_i32 = arith.constant 0 : i32
    %c0_i32_0 = arith.constant 0 : i32
    %c0_i32_1 = arith.constant 0 : i32
    return %c0_i32, %c0_i32_0 : i32, i32
  }
  func.func @transform_2(%arg0: i32) -> (i32, i32) {
    %c0_i32 = arith.constant 0 : i32
    %c0_i32_0 = arith.constant 0 : i32
    return %arg0, %c0_i32 : i32, i32
  }
}

</mosaic_0001>

<llo_original>
// kernel: tpu_custom_call.1
$region0: #{tpu_custom_call.1}
  #allocation0 [shape = 'u32[]', space=smem, size = 0x4, offset = 0x4, fixed_abs, tag = 'smem constant byte address 0x4 - core index']
  #allocation1 [shape = 'u32[144,128]{1,0:T(1,128)}', space=vmem, size = 0x12000, scoped, tag = 'internal scratch']
  %s0 = inlined_call_operand.hbm [shape: f32[16,32], index: 0, kind: input, shape index: {}]
  %s1 = inlined_call_operand.vmem [shape: f32[1,32], index: 1, kind: input, shape index: {}]
  %s2 = inlined_call_operand.hbm [shape: f32[16,32], index: 2, kind: output, shape index: {}]
  %s3 = sld [smem:[#allocation0]]
  $region22: #{tpu_custom_call.1} parent=0
    _
  %s5 = ssub.s32 1, %s3
  %s6 = scalar_select 0, %s5, %s3
  $region1: #{tpu_custom_call.1} parent=0
    #allocation2 [shape = 'u8[8192]{0}', space=vmem, size = 0x2000, scoped, tag = 'input window, operand 0, single buffered']
    #allocation3 [shape = 's32[1]{0}', space=sflag, size = 0x4, scoped, tag = 'scoped memory for tpu_custom_call.1']
    #allocation4 [shape = 's32[1]{0}', space=sflag, size = 0x4, scoped, tag = 'scoped memory for tpu_custom_call.1']
    #allocation5 [shape = 'u8[8192]{0}', space=vmem, size = 0x2000, scoped, tag = 'output window, operand 0, single buffered']
    %7 = vsyncpa [#allocation3], 0
    %8 = vsyncpa [#allocation4], 0
    // Predicated region
    $region2: #{tpu_custom_call.1} parent=1 // pred_check
      _
    $region3: #{tpu_custom_call.1} parent=1 // pred_check_branch
      %10 = sbr.rel (0) target = $region5
    $region4: #{tpu_custom_call.1} parent=1 // pred_region
      %s12 = ssub.s32 256, 256
      %13 = vsyncadd [#allocation3], %s12
      %s14 = sshll.u32 [#allocation2], 4
      %s15 = int_to_ptr.vmem [resolvable:$true] %s14
      %20 = dma.hbm_to_vmem [thread:$0]  %s0, 256, %s15, [#allocation3], 128, 128, 8
    $region5: #{tpu_custom_call.1} parent=1 // pred_fallthru
      _
    // Predicated region
    $region6: #{tpu_custom_call.1} parent=1 // pred_check
      _
    $region7: #{tpu_custom_call.1} parent=1 // pred_check_branch
      %22 = sbr.rel (0) target = $region9
    $region8: #{tpu_custom_call.1} parent=1 // pred_region
      _
    $region9: #{tpu_custom_call.1} parent=1 // pred_fallthru
      _
    // Predicated region
    $region10: #{tpu_custom_call.1} parent=1 // pred_check
      _
    $region11: #{tpu_custom_call.1} parent=1 // pred_check_branch
      %24 = sbr.rel (0) target = $region13
    $region12: #{tpu_custom_call.1} parent=1 // pred_region
      %25 = dma.done [#allocation3], 256
    $region13: #{tpu_custom_call.1} parent=1 // pred_fallthru
      _
    %v26 = vld [vmem:[#allocation2] sm:$0xff]
    %v27 = vld [vmem:[#allocation2 + $0x8] sm:$0xff]
    %v28 = vmul.f32 %v26, %v26
    %v29 = vmul.f32 %v27, %v27
    %vm30 = vcmask 261120
    %v31 = vsel %vm30, %v28, 0.0
    %32 = vadd.xlane.f32.xlu0 %v31
    %v33 = vpop.xlane.xlu0 %32
    %v34 = vsel %vm30, %v29, 0.0
    %35 = vadd.xlane.f32.xlu0 %v34
    %v36 = vpop.xlane.xlu0 %35
    %v37 = vmul.f32 %v33, 0.03125
    %v38 = vmul.f32 %v36, 0.03125
    %v39 = vadd.f32 %v37, 1e-08
    %v40 = vadd.f32 %v38, 1e-08
    %v41 = vrsqrt.pop %v39
    %v42 = vrsqrt.pop %v40
    %v43 = vmul.f32 %v26, %v41
    %v44 = vmul.f32 %v27, %v42
    %v45 = vld [vmem:[%s1] sm:$0x1]
    %v47 = vlaneseq
    %v48 = vshrl.u32 %v47, 7
    %v49 = vsub.s32 0, %v48
    %v50 = vrot.slane %v45, %v49
    %v52 = vmul.f32 %v50, %v43
    %v53 = vmul.f32 %v50, %v44
    %54 = vst.msk [vmem:[#allocation5] sm:$0xff] %vm30, %v52
    %55 = vst.msk [vmem:[#allocation5 + $0x8] sm:$0xff] %vm30, %v53
    // Predicated region
    $region14: #{tpu_custom_call.1} parent=1 // pred_check
      _
    $region15: #{tpu_custom_call.1} parent=1 // pred_check_branch
      %57 = sbr.rel (0) target = $region17
    $region16: #{tpu_custom_call.1} parent=1 // pred_region
      %s59 = ssub.s32 256, 256
      %60 = vsyncadd [#allocation4], %s59
      %s61 = sshll.u32 [#allocation5], 4
      %s62 = int_to_ptr.vmem [resolvable:$true] %s61
      %67 = dma.vmem_to_hbm [thread:$0]  %s62, 256, %s2, [#allocation4], 128, 128, 8
    $region17: #{tpu_custom_call.1} parent=1 // pred_fallthru
      _
    // Predicated region
    $region18: #{tpu_custom_call.1} parent=1 // pred_check
      _
    $region19: #{tpu_custom_call.1} parent=1 // pred_check_branch
      %69 = sbr.rel (0) target = $region21
    $region20: #{tpu_custom_call.1} parent=1 // pred_region
      %70 = dma.done [#allocation4], 256
    $region21: #{tpu_custom_call.1} parent=1 // pred_fallthru
      _
    %71 = vsyncpa [#allocation3], 1
    %72 = vsyncpa [#allocation4], 1

</llo_original>
